<compile_context>
chip_gen: v7x
topology: tpu7x:2x2x1
jax: 0.10.0
libtpu: 0.0.40
codegen_flags: <defaults>
</compile_context>

<pallas_src>
import functools

import jax
import jax.numpy as jnp
from jax.experimental import pallas as pl
from jax.experimental.pallas import tpu as pltpu

_LANE = 128          # lane width (last dim)
_SUBLANE = 8         # f32/bf16-safe sublane multiple (second-to-last dim)
_MAX_BATCH_TILE = 512  # rows per grid step once batch is non-toy


def _round_up(x, m):
    return ((x + m - 1) // m) * m


def _fused_trimodal_kernel(x_ref, enc_w_ref, enc_b_ref, dec_w_ref, dec_b_ref,
                           hid_ref, dec_ref):
    """Two lane-packed block matmuls replace the module's five Linears.

    x_ref     : (tb, K_pack)  bf16   packed [text | imu | pose | 0]
    enc_w_ref : (K_pack, H_pack) bf16 block-diagonal encoder weights
    enc_b_ref : (1, H_pack)   f32    packed encoder biases
    dec_w_ref : (H_pack, O_pack) bf16 block-structured decoder weights
    dec_b_ref : (1, O_pack)   f32    packed decoder biases
    hid_ref   : (tb, H_pack)  f32    [text_out | imu_out | pose_out | 0]
    dec_ref   : (tb, O_pack)  f32    [imu_output_i | imu_output_p | 0]
    """
    # --- Encoders: one MXU issue, f32 accumulate, f32 bias + ReLU epilogue.
    h = jnp.dot(x_ref[...], enc_w_ref[...],
                preferred_element_type=jnp.float32)
    h = jnp.maximum(h + enc_b_ref[...], 0.0)
    hid_ref[...] = h

    # --- Decoders: consume the in-VMEM hidden slab (no HBM round trip).
    # Off-block rows of dec_w are exact zeros, so only the imu / pose hidden
    # slabs contribute to their respective output columns.
    d = jnp.dot(h.astype(dec_w_ref.dtype), dec_w_ref[...],
                preferred_element_type=jnp.float32)
    dec_ref[...] = d + dec_b_ref[...]


@functools.partial(jax.jit, static_argnames=("hidden", "imu_out"))
def trimodal_forward(params, text_input, imu_input, pose_input,
                     *, hidden, imu_out):
    enc_w, enc_b, dec_w, dec_b = params
    k_pack = enc_w.shape[0]
    h_pack = enc_w.shape[1]
    o_pack = dec_w.shape[1]

    B = text_input.shape[0]
    k_used = text_input.shape[1] + imu_input.shape[1] + pose_input.shape[1]

    b_pad = _round_up(B, _SUBLANE)
    tb = min(_MAX_BATCH_TILE, b_pad)
    b_pad = _round_up(b_pad, tb)          # no ragged last batch block
    grid = (b_pad // tb,)

    # Single lane-packed LHS: [text | imu | pose | 0-pad], bf16 for the MXU.
    x = jnp.concatenate(
        [text_input, imu_input, pose_input,
         jnp.zeros((B, k_pack - k_used), text_input.dtype)], axis=1)
    x = jnp.pad(x, ((0, b_pad - B), (0, 0))).astype(enc_w.dtype)

    hid, dec = pl.pallas_call(
        _fused_trimodal_kernel,
        out_shape=(jax.ShapeDtypeStruct((b_pad, h_pack), jnp.float32),
                   jax.ShapeDtypeStruct((b_pad, o_pack), jnp.float32)),
        grid=grid,
        in_specs=[
            pl.BlockSpec((tb, k_pack), lambda i: (i, 0)),       # activations
            pl.BlockSpec((k_pack, h_pack), lambda i: (0, 0)),   # enc weights
            pl.BlockSpec((1, h_pack), lambda i: (0, 0)),        # enc bias
            pl.BlockSpec((h_pack, o_pack), lambda i: (0, 0)),   # dec weights
            pl.BlockSpec((1, o_pack), lambda i: (0, 0)),        # dec bias
        ],
        out_specs=(pl.BlockSpec((tb, h_pack), lambda i: (i, 0)),
                   pl.BlockSpec((tb, o_pack), lambda i: (i, 0))),
        compiler_params=pltpu.CompilerParams(
            dimension_semantics=("parallel",)),
    )(x, enc_w, enc_b, dec_w, dec_b)

    # Slice the two lane-dense slabs back to the module's five outputs.
    text_output = hid[:B, 0:hidden]
    imu_output = hid[:B, hidden:2 * hidden]
    pose_output = hid[:B, 2 * hidden:3 * hidden]
    imu_output_i = dec[:B, 0:imu_out]
    imu_output_p = dec[:B, imu_out:2 * imu_out]
    return (text_output, imu_output, pose_output, imu_output_i, imu_output_p)


def init_linear_params(key, in_features, out_features):
    k_w, k_b = jax.random.split(key)
    scale = 1.0 / jnp.sqrt(jnp.float32(in_features))
    w = jax.random.uniform(
        k_w, (in_features, out_features), jnp.float32, -scale, scale)
    b = jax.random.uniform(k_b, (out_features,), jnp.float32, -scale, scale)
    return w, b


class TriModalDecModelPallas:
    """JAX/Pallas re-implementation of TriModalDecModel.forward.

    text_encoder / imu_encoder / pose_encoder : Linear(in -> hidden) + ReLU
    imu_decoder_i / imu_decoder_p             : Linear(hidden -> imu_out)
    All five layers execute as two lane-packed block matmuls inside one
    fused Pallas kernel.
    """

    def __init__(self, key, text_dim, imu_dim, pose_dim, hidden, imu_out):
        keys = jax.random.split(key, 5)
        self.text_enc = init_linear_params(keys[0], text_dim, hidden)
        self.imu_enc = init_linear_params(keys[1], imu_dim, hidden)
        self.pose_enc = init_linear_params(keys[2], pose_dim, hidden)
        self.imu_dec_i = init_linear_params(keys[3], hidden, imu_out)
        self.imu_dec_p = init_linear_params(keys[4], hidden, imu_out)
        self.hidden = hidden
        self.imu_out = imu_out

        # Pack weights ONCE.  Built from exact zeros (+ .at[].set) so the
        # off-diagonal blocks are exactly zero -> no cross-modal leakage.
        k_pack = _round_up(text_dim + imu_dim + pose_dim, _LANE)
        h_pack = _round_up(3 * hidden, _LANE)
        o_pack = _round_up(2 * imu_out, _LANE)

        enc_w = jnp.zeros((k_pack, h_pack), jnp.float32)
        enc_b = jnp.zeros((1, h_pack), jnp.float32)
        r = 0
        for m, (w, b) in enumerate((self.text_enc, self.imu_enc,
                                    self.pose_enc)):
            kin = w.shape[0]
            enc_w = enc_w.at[r:r + kin, m * hidden:(m + 1) * hidden].set(w)
            enc_b = enc_b.at[0, m * hidden:(m + 1) * hidden].set(b)
            r += kin

        dec_w = jnp.zeros((h_pack, o_pack), jnp.float32)
        dec_b = jnp.zeros((1, o_pack), jnp.float32)
        # imu_decoder_i consumes the imu hidden slab -> output cols [0:imu_out)
        dec_w = dec_w.at[hidden:2 * hidden, 0:imu_out].set(self.imu_dec_i[0])
        dec_b = dec_b.at[0, 0:imu_out].set(self.imu_dec_i[1])
        # imu_decoder_p consumes the pose hidden slab -> cols [imu_out:2*imu_out)
        dec_w = dec_w.at[2 * hidden:3 * hidden,
                         imu_out:2 * imu_out].set(self.imu_dec_p[0])
        dec_b = dec_b.at[0, imu_out:2 * imu_out].set(self.imu_dec_p[1])

        # bf16 weights feed the MXU at native rate; biases stay f32 for the
        # VPU epilogue (f32 accumulation everywhere).
        self.params = (enc_w.astype(jnp.bfloat16), enc_b,
                       dec_w.astype(jnp.bfloat16), dec_b)

    def __call__(self, text_input, imu_input, pose_input):
        return trimodal_forward(self.params, text_input, imu_input,
                                pose_input, hidden=self.hidden,
                                imu_out=self.imu_out)


if __name__ == "__main__":
    key = jax.random.PRNGKey(0)
    k_model, k_text, k_imu, k_pose = jax.random.split(key, 4)

    batch = 8
    text_dim, imu_dim, pose_dim = 32, 24, 48
    hidden, imu_out = 32, 24

    model = TriModalDecModelPallas(
        k_model, text_dim, imu_dim, pose_dim, hidden, imu_out)

    text_input = jax.random.normal(k_text, (batch, text_dim), jnp.float32)
    imu_input = jax.random.normal(k_imu, (batch, imu_dim), jnp.float32)
    pose_input = jax.random.normal(k_pose, (batch, pose_dim), jnp.float32)

    outs = model(text_input, imu_input, pose_input)
    outs = jax.block_until_ready(outs)

    # Correctness check against a plain-JAX reference that applies the same
    # bf16 operand rounding (f32 accumulation), mirroring the kernel math.
    def bf(x):
        return x.astype(jnp.bfloat16).astype(jnp.float32)

    def ref_linear(x, w, b, relu):
        y = bf(x) @ bf(w) + b
        return jnp.maximum(y, 0.0) if relu else y

    t_ref = ref_linear(text_input, *model.text_enc, True)
    i_ref = ref_linear(imu_input, *model.imu_enc, True)
    p_ref = ref_linear(pose_input, *model.pose_enc, True)
    ii_ref = ref_linear(i_ref, *model.imu_dec_i, False)
    ip_ref = ref_linear(p_ref, *model.imu_dec_p, False)

    for got, want in zip(outs, (t_ref, i_ref, p_ref, ii_ref, ip_ref)):
        assert got.shape == want.shape, (got.shape, want.shape)
        assert jnp.allclose(got, want, atol=1e-2, rtol=1e-2), \
            float(jnp.max(jnp.abs(got - want)))

    print("KERNEL_OK")
</pallas_src>

<mosaic_0001>
module attributes {stable_mosaic.version = 11 : i64} {
  func.func @_fused_trimodal_kernel(%arg0: i32, %arg1: memref<8x128xbf16, #tpu.memory_space<vmem>>, %arg2: memref<128x128xbf16, #tpu.memory_space<vmem>>, %arg3: memref<1x128xf32, #tpu.memory_space<vmem>>, %arg4: memref<128x128xbf16, #tpu.memory_space<vmem>>, %arg5: memref<1x128xf32, #tpu.memory_space<vmem>>, %arg6: memref<8x128xf32, #tpu.memory_space<vmem>>, %arg7: memref<8x128xf32, #tpu.memory_space<vmem>>) attributes {dimension_semantics = [#tpu.dimension_semantics<parallel>], iteration_bounds = array<i64: 1>, scalar_prefetch = 0 : i64, scratch_operands = 0 : i64, tpu.core_type = #tpu.core_type<tc>, window_params = [{transform_indices = @transform_0, window_bounds = array<i64: 8, 128>}, {pipeline_mode = #tpu.pipeline_mode<synchronous>, transform_indices = @transform_1, window_bounds = array<i64: 128, 128>}, {pipeline_mode = #tpu.pipeline_mode<synchronous>, transform_indices = @transform_2, window_bounds = array<i64: 1, 128>}, {pipeline_mode = #tpu.pipeline_mode<synchronous>, transform_indices = @transform_3, window_bounds = array<i64: 128, 128>}, {pipeline_mode = #tpu.pipeline_mode<synchronous>, transform_indices = @transform_4, window_bounds = array<i64: 1, 128>}, {transform_indices = @transform_5, window_bounds = array<i64: 8, 128>}, {transform_indices = @transform_6, window_bounds = array<i64: 8, 128>}]} {
    %c0 = arith.constant 0 : index
    %c0_0 = arith.constant 0 : index
    %0 = vector.load %arg1[%c0, %c0_0] : memref<8x128xbf16, #tpu.memory_space<vmem>>, vector<8x128xbf16>
    %c0_1 = arith.constant 0 : index
    %c0_2 = arith.constant 0 : index
    %1 = vector.load %arg2[%c0_1, %c0_2] : memref<128x128xbf16, #tpu.memory_space<vmem>>, vector<128x128xbf16>
    %cst = arith.constant dense<0.000000e+00> : vector<8x128xf32>
    %2 = tpu.matmul %0, %1, %cst {dimension_numbers = #tpu.dot_dimension_numbers<[1], [0], [0], [1], [0, 0, 1, 1], [], []>} : vector<8x128xbf16>, vector<128x128xbf16>, vector<8x128xf32> -> vector<8x128xf32>
    %c0_3 = arith.constant 0 : index
    %c0_4 = arith.constant 0 : index
    %3 = vector.load %arg3[%c0_3, %c0_4] : memref<1x128xf32, #tpu.memory_space<vmem>>, vector<1x128xf32>
    %4 = vector.broadcast %3 : vector<1x128xf32> to vector<8x128xf32>
    %5 = arith.addf %2, %4 : vector<8x128xf32>
    %cst_5 = arith.constant 0.000000e+00 : f32
    %6 = vector.broadcast %cst_5 : f32 to vector<8x128xf32>
    %7 = arith.maximumf %5, %6 : vector<8x128xf32>
    %c0_6 = arith.constant 0 : index
    %c0_7 = arith.constant 0 : index
    %8 = vector.load %arg6[%c0_6, %c0_7] : memref<8x128xf32, #tpu.memory_space<vmem>>, vector<8x128xf32>
    tpu.vector_store %arg6[%c0_6, %c0_7], %7 {strides = array<i32>} : memref<8x128xf32, #tpu.memory_space<vmem>>, vector<8x128xf32>,
    %9 = arith.truncf %7 : vector<8x128xf32> to vector<8x128xbf16>
    %c0_8 = arith.constant 0 : index
    %c0_9 = arith.constant 0 : index
    %10 = vector.load %arg4[%c0_8, %c0_9] : memref<128x128xbf16, #tpu.memory_space<vmem>>, vector<128x128xbf16>
    %cst_10 = arith.constant dense<0.000000e+00> : vector<8x128xf32>
    %11 = tpu.matmul %9, %10, %cst_10 {dimension_numbers = #tpu.dot_dimension_numbers<[1], [0], [0], [1], [0, 0, 1, 1], [], []>} : vector<8x128xbf16>, vector<128x128xbf16>, vector<8x128xf32> -> vector<8x128xf32>
    %c0_11 = arith.constant 0 : index
    %c0_12 = arith.constant 0 : index
    %12 = vector.load %arg5[%c0_11, %c0_12] : memref<1x128xf32, #tpu.memory_space<vmem>>, vector<1x128xf32>
    %13 = vector.broadcast %12 : vector<1x128xf32> to vector<8x128xf32>
    %14 = arith.addf %11, %13 : vector<8x128xf32>
    %c0_13 = arith.constant 0 : index
    %c0_14 = arith.constant 0 : index
    %15 = vector.load %arg7[%c0_13, %c0_14] : memref<8x128xf32, #tpu.memory_space<vmem>>, vector<8x128xf32>
    tpu.vector_store %arg7[%c0_13, %c0_14], %14 {strides = array<i32>} : memref<8x128xf32, #tpu.memory_space<vmem>>, vector<8x128xf32>,
    return
  }
  func.func @transform_0(%arg0: i32) -> (i32, i32) {
    %c0_i32 = arith.constant 0 : i32
    %c0_i32_0 = arith.constant 0 : i32
    return %arg0, %c0_i32 : i32, i32
  }
  func.func @transform_1(%arg0: i32) -> (i32, i32) {
    %c0_i32 = arith.constant 0 : i32
    %c0_i32_0 = arith.constant 0 : i32
    %c0_i32_1 = arith.constant 0 : i32
    return %c0_i32, %c0_i32_0 : i32, i32
  }
  func.func @transform_2(%arg0: i32) -> (i32, i32) {
    %c0_i32 = arith.constant 0 : i32
    %c0_i32_0 = arith.constant 0 : i32
    %c0_i32_1 = arith.constant 0 : i32
    return %c0_i32, %c0_i32_0 : i32, i32
  }
  func.func @transform_3(%arg0: i32) -> (i32, i32) {
    %c0_i32 = arith.constant 0 : i32
    %c0_i32_0 = arith.constant 0 : i32
    %c0_i32_1 = arith.constant 0 : i32
    return %c0_i32, %c0_i32_0 : i32, i32
  }
  func.func @transform_4(%arg0: i32) -> (i32, i32) {
    %c0_i32 = arith.constant 0 : i32
    %c0_i32_0 = arith.constant 0 : i32
    %c0_i32_1 = arith.constant 0 : i32
    return %c0_i32, %c0_i32_0 : i32, i32
  }
  func.func @transform_5(%arg0: i32) -> (i32, i32) {
    %c0_i32 = arith.constant 0 : i32
    %c0_i32_0 = arith.constant 0 : i32
    return %arg0, %c0_i32 : i32, i32
  }
  func.func @transform_6(%arg0: i32) -> (i32, i32) {
    %c0_i32 = arith.constant 0 : i32
    %c0_i32_0 = arith.constant 0 : i32
    return %arg0, %c0_i32 : i32, i32
  }
}

</mosaic_0001>

<llo_original>
// kernel: trimodal_forward.1
$region0: #{trimodal_forward.1}
  #allocation0 [shape = 'u32[]', space=smem, size = 0x4, offset = 0x4, fixed_abs, tag = 'smem constant byte address 0x4 - core index']
  #allocation1 [shape = 'u32[144,128]{1,0:T(1,128)}', space=vmem, size = 0x12000, scoped, tag = 'internal scratch']
  %s0 = inlined_call_operand.vmem [shape: bf16[8,128], index: 0, kind: input, shape index: {}]
  %s1 = inlined_call_operand.hbm [shape: bf16[128,128], index: 1, kind: input, shape index: {}]
  %s2 = inlined_call_operand.vmem [shape: f32[1,128], index: 2, kind: input, shape index: {}]
  %s3 = inlined_call_operand.vmem [shape: bf16[128,128], index: 3, kind: input, shape index: {}]
  %s4 = inlined_call_operand.vmem [shape: f32[1,128], index: 4, kind: input, shape index: {}]
  %s5 = inlined_call_operand.vmem [shape: f32[8,128], index: 5, kind: output, shape index: {0}]
  %s6 = inlined_call_operand.vmem [shape: f32[8,128], index: 6, kind: output, shape index: {1}]
  %7 = xla_tuple %s5, %s6
  %s8 = sld [smem:[#allocation0]]
  $region42: #{trimodal_forward.1} parent=0
    _
  %s10 = ssub.s32 1, %s8
  %s11 = scalar_select 0, %s10, %s8
  $region1: #{trimodal_forward.1} parent=0
    #allocation2 [shape = 'u8[32768]{0}', space=vmem, size = 0x8000, scoped, tag = 'input window, operand 1, single buffered']
    #allocation3 [shape = 's32[1]{0}', space=sflag, size = 0x4, scoped, tag = 'scoped memory for trimodal_forward.1']
    %12 = vsyncpa [#allocation3], 0
    // Predicated region
    $region2: #{trimodal_forward.1} parent=1 // pred_check
      _
    $region3: #{trimodal_forward.1} parent=1 // pred_check_branch
      %14 = sbr.rel (0) target = $region5
    $region4: #{trimodal_forward.1} parent=1 // pred_region
      _
    $region5: #{trimodal_forward.1} parent=1 // pred_fallthru
      _
    // Predicated region
    $region6: #{trimodal_forward.1} parent=1 // pred_check
      _
    $region7: #{trimodal_forward.1} parent=1 // pred_check_branch
      %16 = sbr.rel (0) target = $region9
    $region8: #{trimodal_forward.1} parent=1 // pred_region
      %s18 = ssub.s32 1024, 1024
      %19 = vsyncadd [#allocation3], %s18
      %s20 = sshll.u32 [#allocation2], 4
      %s21 = int_to_ptr.vmem [resolvable:$true] %s20
      %26 = dma.hbm_to_vmem [thread:$0]  %s1, 1024, %s21, [#allocation3], 64, 64, 4
    $region9: #{trimodal_forward.1} parent=1 // pred_fallthru
      _
    // Predicated region
    $region10: #{trimodal_forward.1} parent=1 // pred_check
      _
    $region11: #{trimodal_forward.1} parent=1 // pred_check_branch
      %28 = sbr.rel (0) target = $region13
    $region12: #{trimodal_forward.1} parent=1 // pred_region
      _
    $region13: #{trimodal_forward.1} parent=1 // pred_fallthru
      _
    // Predicated region
    $region14: #{trimodal_forward.1} parent=1 // pred_check
      _
    $region15: #{trimodal_forward.1} parent=1 // pred_check_branch
      %30 = sbr.rel (0) target = $region17
    $region16: #{trimodal_forward.1} parent=1 // pred_region
      _
    $region17: #{trimodal_forward.1} parent=1 // pred_fallthru
      _
    // Predicated region
    $region18: #{trimodal_forward.1} parent=1 // pred_check
      _
    $region19: #{trimodal_forward.1} parent=1 // pred_check_branch
      %32 = sbr.rel (0) target = $region21
    $region20: #{trimodal_forward.1} parent=1 // pred_region
      _
    $region21: #{trimodal_forward.1} parent=1 // pred_fallthru
      _
    // Predicated region
    $region22: #{trimodal_forward.1} parent=1 // pred_check
      _
    $region23: #{trimodal_forward.1} parent=1 // pred_check_branch
      %34 = sbr.rel (0) target = $region25
    $region24: #{trimodal_forward.1} parent=1 // pred_region
      %35 = dma.done [#allocation3], 1024
    $region25: #{trimodal_forward.1} parent=1 // pred_fallthru
      _
    %v37 = vld [vmem:[%s0] sm:$0xf]
    %v38 = vld [vmem:[#allocation2] sm:$0xf]
    %v39 = vld [vmem:[#allocation2 + $0x4] sm:$0xf]
    %v40 = vld [vmem:[#allocation2 + $0x8] sm:$0xf]
    %v41 = vld [vmem:[#allocation2 + $0xc] sm:$0xf]
    %v42 = vld [vmem:[#allocation2 + $0x10] sm:$0xf]
    %v43 = vld [vmem:[#allocation2 + $0x14] sm:$0xf]
    %v44 = vld [vmem:[#allocation2 + $0x18] sm:$0xf]
    %v45 = vld [vmem:[#allocation2 + $0x1c] sm:$0xf]
    %v46 = vld [vmem:[#allocation2 + $0x20] sm:$0xf]
    %v47 = vld [vmem:[#allocation2 + $0x24] sm:$0xf]
    %v48 = vld [vmem:[#allocation2 + $0x28] sm:$0xf]
    %v49 = vld [vmem:[#allocation2 + $0x2c] sm:$0xf]
    %v50 = vld [vmem:[#allocation2 + $0x30] sm:$0xf]
    %v51 = vld [vmem:[#allocation2 + $0x34] sm:$0xf]
    %v52 = vld [vmem:[#allocation2 + $0x38] sm:$0xf]
    %v53 = vld [vmem:[#allocation2 + $0x3c] sm:$0xf]
    %v54 = vld [vmem:[%s2] sm:$0x1]
    %v56 = vlaneseq
    %v57 = vshrl.u32 %v56, 7
    %v58 = vsub.s32 0, %v57
    %v59 = vrot.slane %v54, %v58
    %v77 = vunpack.c.l.b16 %v38
    %v78 = vunpack.c.l.b16 %v39
    %v79 = vunpack.c.l.b16 %v40
    %v80 = vunpack.c.l.b16 %v41
    %v81 = vunpack.c.l.b16 %v42
    %v82 = vunpack.c.l.b16 %v43
    %v83 = vunpack.c.l.b16 %v44
    %v84 = vunpack.c.l.b16 %v45
    %v85 = vunpack.c.l.b16 %v46
    %v86 = vunpack.c.l.b16 %v47
    %v87 = vunpack.c.l.b16 %v48
    %v88 = vunpack.c.l.b16 %v49
    %v89 = vunpack.c.l.b16 %v50
    %v90 = vunpack.c.l.b16 %v51
    %v91 = vunpack.c.l.b16 %v52
    %v92 = vunpack.c.l.b16 %v53
    %v93 = vpack.c.b16 %v78, %v77
    %v94 = vpack.c.b16 %v80, %v79
    %v95 = vpack.c.b16 %v82, %v81
    %v96 = vpack.c.b16 %v84, %v83
    %v97 = vpack.c.b16 %v86, %v85
    %v98 = vpack.c.b16 %v88, %v87
    %v99 = vpack.c.b16 %v90, %v89
    %v100 = vpack.c.b16 %v92, %v91
    %109 = vmatprep.subr.bf16.mxu0 0
    %110 = vmatpush1.bf16.msra.mxu0 %v93
    %111 = vmatprep.subr.bf16.mxu0 0
    %112 = vmatpush1.bf16.msra.mxu0 %v94
    %113 = vmatprep.subr.bf16.mxu0 0
    %114 = vmatpush1.bf16.msra.mxu0 %v95
    %115 = vmatprep.subr.bf16.mxu0 0
    %116 = vmatpush1.bf16.msra.mxu0 %v96
    %117 = vmatprep.subr.bf16.mxu0 0
    %118 = vmatpush1.bf16.msra.mxu0 %v97
    %119 = vmatprep.subr.bf16.mxu0 0
    %120 = vmatpush1.bf16.msra.mxu0 %v98
    %121 = vmatprep.subr.bf16.mxu0 0
    %122 = vmatpush1.bf16.msra.mxu0 %v99
    %123 = vmatprep.subr.bf16.mxu0 0
    %124 = vmatpush1.bf16.msra.mxu0 %v100
    %125 = vmatprep.subr.bf16.mxu0 0
    %126 = vmatpush1.bf16.msra.mxu0 0
    %127 = vmatprep.subr.bf16.mxu0 0
    %128 = vmatpush1.bf16.msra.mxu0 0
    %129 = vmatprep.subr.bf16.mxu0 0
    %130 = vmatpush1.bf16.msra.mxu0 0
    %131 = vmatprep.subr.bf16.mxu0 0
    %132 = vmatpush1.bf16.msra.mxu0 0
    %133 = vmatprep.subr.bf16.mxu0 0
    %134 = vmatpush1.bf16.msra.mxu0 0
    %135 = vmatprep.subr.bf16.mxu0 0
    %136 = vmatpush1.bf16.msra.mxu0 0
    %137 = vmatprep.subr.bf16.mxu0 0
    %138 = vmatpush1.bf16.msra.mxu0 0
    %139 = vmatprep.subr.bf16.mxu0 0
    %140 = vmatpush1.bf16.msra.mxu0 0
    %141 = vmatprep.mubr.bf16.mxu0 0
    %142 = vmatmul.mubr.bf16.gmra.mrb[0].mxu0 %v37
    %v143 = vpop.f32.mrb[0].mxu0
    %v144 = vadd.f32 %v59, %v143
    %v145 = vpop.f32.mrb[0].mxu0
    %v146 = vpop.f32.mrb[0].mxu0
    %v147 = vpop.f32.mrb[0].mxu0
    %148 = vdwg.mxu0
    %v149 = vmax.f32 %v144, 0.0
    %150 = vst [vmem:[%s5] sm:$0xff] %v149
    %v151 = vpack.c.bf16 %v149, %v149
    %v152 = vld [vmem:[%s3] sm:$0xf]
    %v153 = vld [vmem:[%s3 + $0x4] sm:$0xf]
    %v154 = vld [vmem:[%s3 + $0x8] sm:$0xf]
    %v155 = vld [vmem:[%s3 + $0xc] sm:$0xf]
    %v156 = vld [vmem:[%s3 + $0x10] sm:$0xf]
    %v157 = vld [vmem:[%s3 + $0x14] sm:$0xf]
    %v158 = vld [vmem:[%s3 + $0x18] sm:$0xf]
    %v159 = vld [vmem:[%s3 + $0x1c] sm:$0xf]
    %v160 = vld [vmem:[%s3 + $0x20] sm:$0xf]
    %v161 = vld [vmem:[%s3 + $0x24] sm:$0xf]
    %v162 = vld [vmem:[%s3 + $0x28] sm:$0xf]
    %v163 = vld [vmem:[%s3 + $0x2c] sm:$0xf]
    %v164 = vld [vmem:[%s3 + $0x30] sm:$0xf]
    %v165 = vld [vmem:[%s3 + $0x34] sm:$0xf]
    %v166 = vld [vmem:[%s3 + $0x38] sm:$0xf]
    %v167 = vld [vmem:[%s3 + $0x3c] sm:$0xf]
    %v168 = vld [vmem:[%s4] sm:$0x1]
    %v170 = vlaneseq
    %v171 = vshrl.u32 %v170, 7
    %v172 = vsub.s32 0, %v171
    %v173 = vrot.slane %v168, %v172
    %v191 = vunpack.c.l.b16 %v152
    %v192 = vunpack.c.l.b16 %v153
    %v193 = vunpack.c.l.b16 %v154
    %v194 = vunpack.c.l.b16 %v155
    %v195 = vunpack.c.l.b16 %v156
    %v196 = vunpack.c.l.b16 %v157
    %v197 = vunpack.c.l.b16 %v158
    %v198 = vunpack.c.l.b16 %v159
    %v199 = vunpack.c.l.b16 %v160
    %v200 = vunpack.c.l.b16 %v161
    %v201 = vunpack.c.l.b16 %v162
    %v202 = vunpack.c.l.b16 %v163
    %v203 = vunpack.c.l.b16 %v164
    %v204 = vunpack.c.l.b16 %v165
    %v205 = vunpack.c.l.b16 %v166
    %v206 = vunpack.c.l.b16 %v167
    %v207 = vpack.c.b16 %v192, %v191
    %v208 = vpack.c.b16 %v194, %v193
    %v209 = vpack.c.b16 %v196, %v195
    %v210 = vpack.c.b16 %v198, %v197
    %v211 = vpack.c.b16 %v200, %v199
    %v212 = vpack.c.b16 %v202, %v201
    %v213 = vpack.c.b16 %v204, %v203
    %v214 = vpack.c.b16 %v206, %v205
    %223 = vmatprep.subr.bf16.mxu0 0
    %224 = vmatpush1.bf16.msra.mxu0 %v207
    %225 = vmatprep.subr.bf16.mxu0 0
    %226 = vmatpush1.bf16.msra.mxu0 %v208
    %227 = vmatprep.subr.bf16.mxu0 0
    %228 = vmatpush1.bf16.msra.mxu0 %v209
    %229 = vmatprep.subr.bf16.mxu0 0
    %230 = vmatpush1.bf16.msra.mxu0 %v210
    %231 = vmatprep.subr.bf16.mxu0 0
    %232 = vmatpush1.bf16.msra.mxu0 %v211
    %233 = vmatprep.subr.bf16.mxu0 0
    %234 = vmatpush1.bf16.msra.mxu0 %v212
    %235 = vmatprep.subr.bf16.mxu0 0
    %236 = vmatpush1.bf16.msra.mxu0 %v213
    %237 = vmatprep.subr.bf16.mxu0 0
    %238 = vmatpush1.bf16.msra.mxu0 %v214
    %239 = vmatprep.subr.bf16.mxu0 0
    %240 = vmatpush1.bf16.msra.mxu0 0
    %241 = vmatprep.subr.bf16.mxu0 0
    %242 = vmatpush1.bf16.msra.mxu0 0
    %243 = vmatprep.subr.bf16.mxu0 0
    %244 = vmatpush1.bf16.msra.mxu0 0
    %245 = vmatprep.subr.bf16.mxu0 0
    %246 = vmatpush1.bf16.msra.mxu0 0
    %247 = vmatprep.subr.bf16.mxu0 0
    %248 = vmatpush1.bf16.msra.mxu0 0
    %249 = vmatprep.subr.bf16.mxu0 0
    %250 = vmatpush1.bf16.msra.mxu0 0
    %251 = vmatprep.subr.bf16.mxu0 0
    %252 = vmatpush1.bf16.msra.mxu0 0
    %253 = vmatprep.subr.bf16.mxu0 0
    %254 = vmatpush1.bf16.msra.mxu0 0
    %255 = vmatprep.mubr.bf16.mxu0 0
    %256 = vmatmul.mubr.bf16.gmra.mrb[0].mxu0 %v151
    %v257 = vpop.f32.mrb[0].mxu0
    %v258 = vadd.f32 %v173, %v257
    %v259 = vpop.f32.mrb[0].mxu0
    %v260 = vpop.f32.mrb[0].mxu0
    %v261 = vpop.f32.mrb[0].mxu0
    %262 = vdwg.mxu0
    %263 = vst [vmem:[%s6] sm:$0xff] %v258
    // Predicated region
    $region26: #{trimodal_forward.1} parent=1 // pred_check
      _
    $region27: #{trimodal_forward.1} parent=1 // pred_check_branch
      %265 = sbr.rel (0) target = $region29
    $region28: #{trimodal_forward.1} parent=1 // pred_region
      _
    $region29: #{trimodal_forward.1} parent=1 // pred_fallthru
      _
    // Predicated region
    $region30: #{trimodal_forward.1} parent=1 // pred_check
      _
    $region31: #{trimodal_forward.1} parent=1 // pred_check_branch
      %267 = sbr.rel (0) target = $region33
    $region32: #{trimodal_forward.1} parent=1 // pred_region
      _
    $region33: #{trimodal_forward.1} parent=1 // pred_fallthru
      _
    // Predicated region
    $region34: #{trimodal_forward.1} parent=1 // pred_check
      _
    $region35: #{trimodal_forward.1} parent=1 // pred_check_branch
      %269 = sbr.rel (0) target = $region37
    $region36: #{trimodal_forward.1} parent=1 // pred_region
      _
    $region37: #{trimodal_forward.1} parent=1 // pred_fallthru
      _
    // Predicated region
    $region38: #{trimodal_forward.1} parent=1 // pred_check
      _
    $region39: #{trimodal_forward.1} parent=1 // pred_check_branch
      %271 = sbr.rel (0) target = $region41
    $region40: #{trimodal_forward.1} parent=1 // pred_region
      _
    $region41: #{trimodal_forward.1} parent=1 // pred_fallthru
      _
    %272 = vsyncpa [#allocation3], 1

</llo_original>
